<compile_context>
chip_gen: v6e
topology: v6e:2x2x1
jax: 0.10.0
libtpu: 0.0.40
codegen_flags: <defaults>
</compile_context>

<pallas_src>
import jax
import jax.numpy as jnp
from jax.experimental import pallas as pl
from jax.experimental.pallas import tpu as pltpu


ROWS_PER_VROW = 8  # batch rows packed into one VMEM row (sublane-dense packing)


def _round_up(n, m):
    return ((n + m - 1) // m) * m


def _linear_stack_kernel(x_ref, w_ref, b_ref, o_ref):
    # x_ref: (tile_p, 96)   8 packed batch rows of 12 features per VMEM row
    # w_ref: (96, 128)      block-diagonal kron(I8, [W^T | W^T]) (resident)
    # b_ref: (1, 128)       bias tiled 8x over the packed groups (resident)
    # o_ref: (tile_p, 128)  8 packed output rows of 16 (= [y, y]) per VMEM row
    o_ref[...] = (
        jnp.dot(x_ref[...], w_ref[...], preferred_element_type=jnp.float32)
        + b_ref[...]
    ).astype(o_ref.dtype)


def model_forward(x, w, b, *, tile_p=1024, small_batch_fallback=True):
    """x: (B, 12) f32, w: (8, 12) f32 (PyTorch nn.Linear layout), b: (8,) f32
    -> (B, 2, 8) f32, matching `torch.stack((x @ W.T + b,)*2, dim=1)`.
    """
    B, in_f = x.shape
    out_f = w.shape[0]

    x = jnp.asarray(x, jnp.float32)
    w = jnp.asarray(w, jnp.float32)
    b = jnp.asarray(b, jnp.float32)

    # For tiny batches the pallas_call launch overhead dominates; let XLA fuse it.
    if small_batch_fallback and B < 4096:
        y = x @ w.T + b
        return jnp.stack((y, y), axis=1)

    # --- one-time weight preparation (stack fused + block-diagonal packing) ---
    w16 = jnp.concatenate([w.T, w.T], axis=1)                 # (12, 16)
    b16 = jnp.concatenate([b, b]).reshape(1, 2 * out_f)       # (1, 16)
    wbd = jnp.kron(jnp.eye(ROWS_PER_VROW, dtype=jnp.float32), w16)  # (96, 128)
    bbd = jnp.tile(b16, (1, ROWS_PER_VROW))                   # (1, 128)

    packed_in = ROWS_PER_VROW * in_f        # 96
    packed_out = ROWS_PER_VROW * 2 * out_f  # 128

    # --- tiling over packed rows (P = batch rows / 8) ---
    P = pl.cdiv(B, ROWS_PER_VROW)
    P8 = _round_up(P, 8)
    tile_p = max(8, _round_up(min(tile_p, P8), 8))
    # Give v7x's two TensorCores work when a single step would hold everything.
    if P8 // tile_p < 2 and P8 >= 16:
        tile_p = max(8, _round_up(pl.cdiv(P8, 2), 8))
    padded_P = _round_up(P8, tile_p)
    padded_B = padded_P * ROWS_PER_VROW

    if padded_B != B:
        x = jnp.pad(x, ((0, padded_B - B), (0, 0)))
    xp = x.reshape(padded_P, packed_in)     # free, contiguous reshape

    grid = (padded_P // tile_p,)

    out = pl.pallas_call(
        _linear_stack_kernel,
        out_shape=jax.ShapeDtypeStruct((padded_P, packed_out), jnp.float32),
        grid_spec=pltpu.PrefetchScalarGridSpec(
            num_scalar_prefetch=0,
            grid=grid,
            in_specs=[
                pl.BlockSpec((tile_p, packed_in), lambda i: (i, 0)),       # x tile
                pl.BlockSpec((packed_in, packed_out), lambda i: (0, 0)),   # Wbd (resident)
                pl.BlockSpec((1, packed_out), lambda i: (0, 0)),           # bias (resident)
            ],
            out_specs=pl.BlockSpec((tile_p, packed_out), lambda i: (i, 0)),
        ),
        compiler_params=pltpu.CompilerParams(
            dimension_semantics=("parallel",),
        ),
        cost_estimate=pl.CostEstimate(
            flops=2 * padded_B * in_f * 2 * out_f,
            transcendentals=0,
            bytes_accessed=padded_B * (in_f + 2 * out_f) * 4,
        ),
    )(xp, wbd, bbd)

    # (padded_P, 128) bytes == (padded_B, 16) bytes == (padded_B, 2, 8) bytes.
    # Slice the padded rows (they hold bias values, not zeros) then free-reshape.
    return out.reshape(padded_B, 2 * out_f)[:B].reshape(B, 2, out_f)


if __name__ == "__main__":
    key = jax.random.PRNGKey(0)
    kx, kw, kb = jax.random.split(key, 3)

    B, IN_F, OUT_F = 2, 12, 8
    x = jax.random.normal(kx, (B, IN_F), dtype=jnp.float32)
    # Deterministic nn.Linear-style init: U(-1/sqrt(in), 1/sqrt(in))
    bound = 1.0 / jnp.sqrt(jnp.float32(IN_F))
    w = jax.random.uniform(kw, (OUT_F, IN_F), dtype=jnp.float32,
                           minval=-bound, maxval=bound)
    b = jax.random.uniform(kb, (OUT_F,), dtype=jnp.float32,
                           minval=-bound, maxval=bound)

    # Force the Pallas path so the kernel is exercised even at this tiny batch.
    out = model_forward(x, w, b, small_batch_fallback=False)
    jax.block_until_ready(out)

    # Reference: y = x @ W.T + b, stacked on dim 1.
    ref_y = x @ w.T + b
    ref = jnp.stack((ref_y, ref_y), axis=1)
    assert out.shape == (B, 2, OUT_F), out.shape
    assert jnp.allclose(out, ref, atol=1e-5, rtol=1e-5), "mismatch vs reference"

    # Batch that is not a multiple of 8 (exercises the padded tail path).
    B2 = 37
    x2 = jax.random.normal(jax.random.PRNGKey(1), (B2, IN_F), dtype=jnp.float32)
    out2 = model_forward(x2, w, b, tile_p=8, small_batch_fallback=False)
    jax.block_until_ready(out2)
    ref2_y = x2 @ w.T + b
    ref2 = jnp.stack((ref2_y, ref2_y), axis=1)
    assert out2.shape == (B2, 2, OUT_F), out2.shape
    assert jnp.allclose(out2, ref2, atol=1e-5, rtol=1e-5), "mismatch vs reference (tail)"

    # Larger batch: multi-step grid ("parallel" axis, both v7x cores get work).
    B3 = 40000
    x3 = jax.random.normal(jax.random.PRNGKey(2), (B3, IN_F), dtype=jnp.float32)
    out3 = model_forward(x3, w, b, small_batch_fallback=False)
    jax.block_until_ready(out3)
    ref3_y = x3 @ w.T + b
    ref3 = jnp.stack((ref3_y, ref3_y), axis=1)
    assert out3.shape == (B3, 2, OUT_F), out3.shape
    assert jnp.allclose(out3, ref3, atol=1e-5, rtol=1e-5), "mismatch vs reference (large)"

    print("KERNEL_OK")
</pallas_src>

<mosaic_0001>
module attributes {stable_mosaic.version = 11 : i64} {
  func.func @_linear_stack_kernel(%arg0: i32, %arg1: memref<8x96xf32, #tpu.memory_space<vmem>>, %arg2: memref<96x128xf32, #tpu.memory_space<vmem>>, %arg3: memref<1x128xf32, #tpu.memory_space<vmem>>, %arg4: memref<8x128xf32, #tpu.memory_space<vmem>>) attributes {dimension_semantics = [#tpu.dimension_semantics<parallel>], iteration_bounds = array<i64: 1>, scalar_prefetch = 0 : i64, scratch_operands = 0 : i64, tpu.core_type = #tpu.core_type<tc>, window_params = [{transform_indices = @transform_0, window_bounds = array<i64: 8, 96>}, {pipeline_mode = #tpu.pipeline_mode<synchronous>, transform_indices = @transform_1, window_bounds = array<i64: 96, 128>}, {pipeline_mode = #tpu.pipeline_mode<synchronous>, transform_indices = @transform_2, window_bounds = array<i64: 1, 128>}, {transform_indices = @transform_3, window_bounds = array<i64: 8, 128>}]} {
    %c0 = arith.constant 0 : index
    %c0_0 = arith.constant 0 : index
    %0 = vector.load %arg1[%c0, %c0_0] : memref<8x96xf32, #tpu.memory_space<vmem>>, vector<8x96xf32>
    %c0_1 = arith.constant 0 : index
    %c0_2 = arith.constant 0 : index
    %1 = vector.load %arg2[%c0_1, %c0_2] : memref<96x128xf32, #tpu.memory_space<vmem>>, vector<96x128xf32>
    %cst = arith.constant dense<0.000000e+00> : vector<8x128xf32>
    %2 = tpu.matmul %0, %1, %cst {dimension_numbers = #tpu.dot_dimension_numbers<[1], [0], [0], [1], [0, 0, 1, 1], [], []>} : vector<8x96xf32>, vector<96x128xf32>, vector<8x128xf32> -> vector<8x128xf32>
    %c0_3 = arith.constant 0 : index
    %c0_4 = arith.constant 0 : index
    %3 = vector.load %arg3[%c0_3, %c0_4] : memref<1x128xf32, #tpu.memory_space<vmem>>, vector<1x128xf32>
    %4 = vector.broadcast %3 : vector<1x128xf32> to vector<8x128xf32>
    %5 = arith.addf %2, %4 : vector<8x128xf32>
    %c0_5 = arith.constant 0 : index
    %c0_6 = arith.constant 0 : index
    %6 = vector.load %arg4[%c0_5, %c0_6] : memref<8x128xf32, #tpu.memory_space<vmem>>, vector<8x128xf32>
    tpu.vector_store %arg4[%c0_5, %c0_6], %5 {strides = array<i32>} : memref<8x128xf32, #tpu.memory_space<vmem>>, vector<8x128xf32>,
    return
  }
  func.func @transform_0(%arg0: i32) -> (i32, i32) {
    %c0_i32 = arith.constant 0 : i32
    %c0_i32_0 = arith.constant 0 : i32
    return %arg0, %c0_i32 : i32, i32
  }
  func.func @transform_1(%arg0: i32) -> (i32, i32) {
    %c0_i32 = arith.constant 0 : i32
    %c0_i32_0 = arith.constant 0 : i32
    %c0_i32_1 = arith.constant 0 : i32
    return %c0_i32, %c0_i32_0 : i32, i32
  }
  func.func @transform_2(%arg0: i32) -> (i32, i32) {
    %c0_i32 = arith.constant 0 : i32
    %c0_i32_0 = arith.constant 0 : i32
    %c0_i32_1 = arith.constant 0 : i32
    return %c0_i32, %c0_i32_0 : i32, i32
  }
  func.func @transform_3(%arg0: i32) -> (i32, i32) {
    %c0_i32 = arith.constant 0 : i32
    %c0_i32_0 = arith.constant 0 : i32
    return %arg0, %c0_i32 : i32, i32
  }
}

</mosaic_0001>

<llo_original>
// kernel: tpu_custom_call.1
$region0: #{tpu_custom_call.1}
  #allocation0 [shape = 'u32[]', space=smem, size = 0x4, offset = 0x4, fixed_abs, tag = 'smem constant byte address 0x4 - core index']
  #allocation1 [shape = 'u32[144,128]{1,0:T(1,128)}', space=vmem, size = 0x12000, scoped, tag = 'internal scratch']
  %s0 = inlined_call_operand.hbm [shape: f32[8,96], index: 0, kind: input, shape index: {}]
  %s1 = inlined_call_operand.hbm [shape: f32[96,128], index: 1, kind: input, shape index: {}]
  %s2 = inlined_call_operand.vmem [shape: f32[1,128], index: 2, kind: input, shape index: {}]
  %s3 = inlined_call_operand.hbm [shape: f32[8,128], index: 3, kind: output, shape index: {}]
  %s4 = sld [smem:[#allocation0]]
  $region30: #{tpu_custom_call.1} parent=0
    _
  %s6 = ssub.s32 1, %s4
  %s7 = scalar_select 0, %s6, %s4
  $region1: #{tpu_custom_call.1} parent=0
    #allocation2 [shape = 'u8[4096]{0}', space=vmem, size = 0x1000, scoped, tag = 'input window, operand 0, single buffered']
    #allocation3 [shape = 's32[1]{0}', space=sflag, size = 0x4, scoped, tag = 'scoped memory for tpu_custom_call.1']
    #allocation4 [shape = 's32[1]{0}', space=sflag, size = 0x4, scoped, tag = 'scoped memory for tpu_custom_call.1']
    #allocation5 [shape = 'u8[49152]{0}', space=vmem, size = 0xc000, scoped, tag = 'input window, operand 1, single buffered']
    #allocation6 [shape = 's32[1]{0}', space=sflag, size = 0x4, scoped, tag = 'scoped memory for tpu_custom_call.1']
    #allocation7 [shape = 'u8[4096]{0}', space=vmem, size = 0x1000, scoped, tag = 'output window, operand 0, single buffered']
    %8 = vsyncpa [#allocation3], 0
    %9 = vsyncpa [#allocation6], 0
    %10 = vsyncpa [#allocation4], 0
    // Predicated region
    $region2: #{tpu_custom_call.1} parent=1 // pred_check
      _
    $region3: #{tpu_custom_call.1} parent=1 // pred_check_branch
      %12 = sbr.rel (0) target = $region5
    $region4: #{tpu_custom_call.1} parent=1 // pred_region
      %s14 = ssub.s32 128, 128
      %15 = vsyncadd [#allocation3], %s14
      %s17 = sshll.u32 [#allocation2], 4
      %s18 = int_to_ptr.vmem [resolvable:$true] %s17
      %20 = dma.hbm_to_vmem [thread:$0]  %s0, 128, %s18, [#allocation3]
    $region5: #{tpu_custom_call.1} parent=1 // pred_fallthru
      _
    // Predicated region
    $region6: #{tpu_custom_call.1} parent=1 // pred_check
      _
    $region7: #{tpu_custom_call.1} parent=1 // pred_check_branch
      %22 = sbr.rel (0) target = $region9
    $region8: #{tpu_custom_call.1} parent=1 // pred_region
      %s24 = ssub.s32 1536, 1536
      %25 = vsyncadd [#allocation6], %s24
      %s26 = sshll.u32 [#allocation5], 4
      %s27 = int_to_ptr.vmem [resolvable:$true] %s26
      %32 = dma.hbm_to_vmem [thread:$0]  %s1, 1536, %s27, [#allocation6], 128, 128, 8
    $region9: #{tpu_custom_call.1} parent=1 // pred_fallthru
      _
    // Predicated region
    $region10: #{tpu_custom_call.1} parent=1 // pred_check
      _
    $region11: #{tpu_custom_call.1} parent=1 // pred_check_branch
      %34 = sbr.rel (0) target = $region13
    $region12: #{tpu_custom_call.1} parent=1 // pred_region
      _
    $region13: #{tpu_custom_call.1} parent=1 // pred_fallthru
      _
    // Predicated region
    $region14: #{tpu_custom_call.1} parent=1 // pred_check
      _
    $region15: #{tpu_custom_call.1} parent=1 // pred_check_branch
      %36 = sbr.rel (0) target = $region17
    $region16: #{tpu_custom_call.1} parent=1 // pred_region
      %37 = dma.done [#allocation3], 128
    $region17: #{tpu_custom_call.1} parent=1 // pred_fallthru
      _
    // Predicated region
    $region18: #{tpu_custom_call.1} parent=1 // pred_check
      _
    $region19: #{tpu_custom_call.1} parent=1 // pred_check_branch
      %39 = sbr.rel (0) target = $region21
    $region20: #{tpu_custom_call.1} parent=1 // pred_region
      %40 = dma.done [#allocation6], 1536
    $region21: #{tpu_custom_call.1} parent=1 // pred_fallthru
      _
    %v41 = vld [vmem:[#allocation2] sm:$0xff]
    %v42 = vld [vmem:[#allocation5] sm:$0xff]
    %v43 = vld [vmem:[#allocation5 + $0x8] sm:$0xff]
    %v44 = vld [vmem:[#allocation5 + $0x10] sm:$0xff]
    %v45 = vld [vmem:[#allocation5 + $0x18] sm:$0xff]
    %v46 = vld [vmem:[#allocation5 + $0x20] sm:$0xff]
    %v47 = vld [vmem:[#allocation5 + $0x28] sm:$0xff]
    %v48 = vld [vmem:[#allocation5 + $0x30] sm:$0xff]
    %v49 = vld [vmem:[#allocation5 + $0x38] sm:$0xff]
    %v50 = vld [vmem:[#allocation5 + $0x40] sm:$0xff]
    %v51 = vld [vmem:[#allocation5 + $0x48] sm:$0xff]
    %v52 = vld [vmem:[#allocation5 + $0x50] sm:$0xff]
    %v53 = vld [vmem:[#allocation5 + $0x58] sm:$0xff]
    %v54 = vld [vmem:[%s2] sm:$0x1]
    %v56 = vlaneseq
    %v57 = vshrl.u32 %v56, 7
    %v58 = vsub.s32 0, %v57
    %v59 = vrot.slane %v54, %v58
    %vm61 = vcmask 785408
    %v63 = vsel %vm61, %v41, 0
    %65 = vmatprep.subr.mxu0 0.0
    %66 = vmatpush1.msra.mxu0 0.0
    %67 = vmatprep.subr.mxu0 0.0
    %68 = vmatpush1.msra.mxu0 0.0
    %69 = vmatprep.subr.mxu0 0.0
    %70 = vmatpush1.msra.mxu0 0.0
    %71 = vmatprep.subr.mxu0 0.0
    %72 = vmatpush1.msra.mxu0 0.0
    %73 = vmatprep.subr.mxu0 0.0
    %74 = vmatpush1.msra.mxu0 %v53
    %75 = vmatprep.subr.mxu0 0.0
    %76 = vmatpush1.msra.mxu0 %v52
    %77 = vmatprep.subr.mxu0 0.0
    %78 = vmatpush1.msra.mxu0 %v51
    %79 = vmatprep.subr.mxu0 0.0
    %80 = vmatpush1.msra.mxu0 %v50
    %81 = vmatprep.subr.mxu0 0.0
    %82 = vmatpush1.msra.mxu0 %v49
    %83 = vmatprep.subr.mxu0 0.0
    %84 = vmatpush1.msra.mxu0 %v48
    %85 = vmatprep.subr.mxu0 0.0
    %86 = vmatpush1.msra.mxu0 %v47
    %87 = vmatprep.subr.mxu0 0.0
    %88 = vmatpush1.msra.mxu0 %v46
    %89 = vmatprep.subr.mxu0 0.0
    %90 = vmatpush1.msra.mxu0 %v45
    %91 = vmatprep.subr.mxu0 0.0
    %92 = vmatpush1.msra.mxu0 %v44
    %93 = vmatprep.subr.mxu0 0.0
    %94 = vmatpush1.msra.mxu0 %v43
    %95 = vmatprep.subr.mxu0 0.0
    %96 = vmatpush1.msra.mxu0 %v42
    %97 = vmatprep.subr.mxu0 0.0
    %98 = vmatpush2.msra.mxu0 0.0
    %99 = vmatprep.subr.mxu0 0.0
    %100 = vmatpush2.msra.mxu0 0.0
    %101 = vmatprep.subr.mxu0 0.0
    %102 = vmatpush2.msra.mxu0 0.0
    %103 = vmatprep.subr.mxu0 0.0
    %104 = vmatpush2.msra.mxu0 0.0
    %105 = vmatprep.subr.mxu0 0.0
    %106 = vmatpush2.msra.mxu0 0.0
    %107 = vmatprep.subr.mxu0 0.0
    %108 = vmatpush2.msra.mxu0 0.0
    %109 = vmatprep.subr.mxu0 0.0
    %110 = vmatpush2.msra.mxu0 0.0
    %111 = vmatprep.subr.mxu0 0.0
    %112 = vmatpush2.msra.mxu0 0.0
    %113 = vmatprep.subr.mxu0 0.0
    %114 = vmatpush2.msra.mxu0 0.0
    %115 = vmatprep.subr.mxu0 0.0
    %116 = vmatpush2.msra.mxu0 0.0
    %117 = vmatprep.subr.mxu0 0.0
    %118 = vmatpush2.msra.mxu0 0.0
    %119 = vmatprep.subr.mxu0 0.0
    %120 = vmatpush2.msra.mxu0 0.0
    %121 = vmatprep.subr.mxu0 0.0
    %122 = vmatpush2.msra.mxu0 0.0
    %123 = vmatprep.subr.mxu0 0.0
    %124 = vmatpush2.msra.mxu0 0.0
    %125 = vmatprep.subr.mxu0 0.0
    %126 = vmatpush2.msra.mxu0 0.0
    %127 = vmatprep.subr.mxu0 0.0
    %128 = vmatpush2.msra.mxu0 0.0
    %129 = vmatprep.mubr.f32.mxu0 0.0
    %130 = vmatmul.mubr.f32.gmra.mxu0 %v63
    %v131 = vpop.f32.mrf.mxu0
    %v132 = vadd.f32 %v59, %v131
    %v133 = vpop.f32.mrf.mxu0
    %134 = vdwg.mxu0
    %135 = vst [vmem:[#allocation7] sm:$0xff] %v132
    // Predicated region
    $region22: #{tpu_custom_call.1} parent=1 // pred_check
      _
    $region23: #{tpu_custom_call.1} parent=1 // pred_check_branch
      %137 = sbr.rel (0) target = $region25
    $region24: #{tpu_custom_call.1} parent=1 // pred_region
      %s139 = ssub.s32 128, 128
      %140 = vsyncadd [#allocation4], %s139
      %s142 = sshll.u32 [#allocation7], 4
      %s143 = int_to_ptr.vmem [resolvable:$true] %s142
      %145 = dma.vmem_to_hbm [thread:$0]  %s143, 128, %s3, [#allocation4]
    $region25: #{tpu_custom_call.1} parent=1 // pred_fallthru
      _
    // Predicated region
    $region26: #{tpu_custom_call.1} parent=1 // pred_check
      _
    $region27: #{tpu_custom_call.1} parent=1 // pred_check_branch
      %147 = sbr.rel (0) target = $region29
    $region28: #{tpu_custom_call.1} parent=1 // pred_region
      %148 = dma.done [#allocation4], 128
    $region29: #{tpu_custom_call.1} parent=1 // pred_fallthru
      _
    %149 = vsyncpa [#allocation3], 1
    %150 = vsyncpa [#allocation6], 1
    %151 = vsyncpa [#allocation4], 1

</llo_original>
